<compile_context>
chip_gen: v7x
topology: tpu7x:2x2x1
jax: 0.10.0
libtpu: 0.0.40
codegen_flags: <defaults>
</compile_context>

<pallas_src>
import math

import jax
import jax.numpy as jnp
import numpy as np
from jax.experimental import pallas as pl
from jax.experimental.pallas import tpu as pltpu


# ----------------------------- fused Pallas kernel ---------------------------

def rsgcn_fused_kernel(x_ref, adj_ref, sadj_ref,
                       w1_ref, b1_ref, af1_w_ref,
                       w2_ref, b2_ref, out_ref):
    H = w1_ref.shape[1] // 3       # nhid
    C = w2_ref.shape[1] // 3       # nclass

    b1 = b1_ref[...].astype(jnp.float32)      # (1, 3H)
    b2 = b2_ref[...].astype(jnp.float32)      # (1, 3C)

    # ---- layer 1: one wide projection x @ [W1r1 | W1r2 | Wm1] ----------------
    s1 = jnp.dot(x_ref[...], w1_ref[...],
                 preferred_element_type=jnp.float32)              # (N, 3H) f32
    x_r1 = jnp.dot(adj_ref[...], s1[:, 0:H],
                   preferred_element_type=jnp.float32) + b1[:, 0:H]
    x_r2 = jnp.dot(sadj_ref[...], s1[:, H:2 * H],
                   preferred_element_type=jnp.float32) + b1[:, H:2 * H]
    x_m = jnp.tanh(s1[:, 2 * H:3 * H] + b1[:, 2 * H:3 * H])

    # ---- attention fusion ----------------------------------------------------
    # NOTE: the attention operates on the POST-adjacency features, so we must
    # concatenate x_r1/x_r2/x_m (not the pre-adjacency s1) before the (3H, 3) dot.
    cat = jnp.concatenate([x_r1, x_r2, x_m], axis=-1)             # (N, 3H)
    logits = jnp.abs(jnp.dot(cat, af1_w_ref[...].astype(jnp.float32),
                             preferred_element_type=jnp.float32))  # (N, 3)
    a0 = logits[:, 0:1]
    a1 = logits[:, 1:2]
    a2 = logits[:, 2:3]
    m = jnp.maximum(jnp.maximum(a0, a1), a2)
    e0 = jnp.exp(a0 - m)
    e1 = jnp.exp(a1 - m)
    e2 = jnp.exp(a2 - m)
    # exact reciprocal (approx=True would break the rtol=1e-5 check vs. reference)
    inv = pl.reciprocal(e0 + e1 + e2, approx=False)
    x1 = x_r1 * (e0 * inv) + x_r2 * (e1 * inv) + x_m * (e2 * inv)  # (N, H) f32

    # ---- layer 2: one wide projection x1 @ [W2r1 | W2r2 | Wm2] ---------------
    s2 = jnp.dot(x1, w2_ref[...], preferred_element_type=jnp.float32)   # (N, 3C)
    o_r1 = jnp.dot(adj_ref[...], s2[:, 0:C],
                   preferred_element_type=jnp.float32) + b2[:, 0:C]
    o_r2 = jnp.dot(sadj_ref[...], s2[:, C:2 * C],
                   preferred_element_type=jnp.float32) + b2[:, C:2 * C]
    o_m = jnp.tanh(s2[:, 2 * C:3 * C] + b2[:, 2 * C:3 * C])

    out_ref[...] = (o_r2 + o_r1 + o_m).astype(out_ref.dtype)


# ------------------------------ wrapper ---------------------------------------

_VMEM_SPEC = pl.BlockSpec(memory_space=pltpu.MemorySpace.VMEM)


def rsgcn_forward(x, adj, s_adj, params, use_bf16=False):
    """Whole-forward fused pallas_call; all operands live wholly in VMEM (~0.6 MiB)."""
    # Concatenate per-branch weights so each layer is ONE wide MXU matmul.
    w1 = jnp.concatenate([params["w1r1"], params["w1r2"], params["wm1"]], axis=1)
    b1 = jnp.concatenate([params["b1r1"], params["b1r2"], params["bm1"]], axis=1)
    w2 = jnp.concatenate([params["w2r1"], params["w2r2"], params["wm2"]], axis=1)
    b2 = jnp.concatenate([params["b2r1"], params["b2r2"], params["bm2"]], axis=1)
    af1_w = params["af1_w"]

    if use_bf16:
        # MXU operands in bf16 (v6e/v7x native); accumulation (preferred_element_type)
        # and all elementwise math stay f32 inside the kernel. Biases stay f32.
        cast = lambda a: a.astype(jnp.bfloat16)
        x, adj, s_adj, w1, w2, af1_w = map(cast, (x, adj, s_adj, w1, w2, af1_w))

    N = x.shape[0]
    nclass = params["w2r1"].shape[1]

    return pl.pallas_call(
        rsgcn_fused_kernel,
        out_shape=jax.ShapeDtypeStruct((N, nclass), jnp.float32),
        in_specs=[_VMEM_SPEC] * 8,
        out_specs=_VMEM_SPEC,
    )(x, adj, s_adj, w1, b1, af1_w, w2, b2)


# ---------------------------- pure-JAX reference ------------------------------

def rsgcn_reference(x, adj, s_adj, p):
    def gcn(h, a, w, b):
        return a @ (h @ w) + b

    def att(a1, a2, a3, w):
        logits = jnp.abs(jnp.concatenate([a1, a2, a3], axis=-1) @ w)
        coef = jax.nn.softmax(logits, axis=-1)
        stk = jnp.stack([a1, a2, a3], axis=-1)
        return jnp.sum(stk * coef[:, None, :], axis=-1)

    x_r1 = gcn(x, adj, p["w1r1"], p["b1r1"])
    x_r2 = gcn(x, s_adj, p["w1r2"], p["b1r2"])
    x_m = jnp.tanh(x @ p["wm1"] + p["bm1"])
    x1 = att(x_r1, x_r2, x_m, p["af1_w"])
    x_r1 = gcn(x1, adj, p["w2r1"], p["b2r1"])
    x_r2 = gcn(x1, s_adj, p["w2r2"], p["b2r2"])
    x_m = jnp.tanh(x1 @ p["wm2"] + p["bm2"])
    return x_r2 + x_r1 + x_m


# ------------------------------- main -----------------------------------------

def _uniform(key, shape, bound):
    return jax.random.uniform(key, shape, jnp.float32, -bound, bound)


if __name__ == "__main__":
    N, IN_F, NHID, NCLASS = 8, 768, 32, 2

    key = jax.random.PRNGKey(0)
    keys = jax.random.split(key, 16)

    # deterministic synthetic parameter init (mimics uniform(-stdv, stdv))
    params = {
        "w1r1": _uniform(keys[0], (IN_F, NHID), 1.0 / math.sqrt(NHID)),
        "b1r1": _uniform(keys[1], (1, NHID), 1.0 / math.sqrt(NHID)),
        "w1r2": _uniform(keys[2], (IN_F, NHID), 1.0 / math.sqrt(NHID)),
        "b1r2": _uniform(keys[3], (1, NHID), 1.0 / math.sqrt(NHID)),
        "wm1":  _uniform(keys[4], (IN_F, NHID), 1.0 / math.sqrt(IN_F)),
        "bm1":  _uniform(keys[5], (1, NHID), 1.0 / math.sqrt(IN_F)),
        "af1_w": _uniform(keys[6], (3 * NHID, 3), 1.0 / math.sqrt(3 * NHID)),
        "w2r1": _uniform(keys[7], (NHID, NCLASS), 1.0 / math.sqrt(NCLASS)),
        "b2r1": _uniform(keys[8], (1, NCLASS), 1.0 / math.sqrt(NCLASS)),
        "w2r2": _uniform(keys[9], (NHID, NCLASS), 1.0 / math.sqrt(NCLASS)),
        "b2r2": _uniform(keys[10], (1, NCLASS), 1.0 / math.sqrt(NCLASS)),
        "wm2":  _uniform(keys[11], (NHID, NCLASS), 1.0 / math.sqrt(NHID)),
        "bm2":  _uniform(keys[12], (1, NCLASS), 1.0 / math.sqrt(NHID)),
    }

    # example inputs
    x = jax.random.normal(keys[13], (N, IN_F), jnp.float32)
    adj_raw = jax.random.uniform(keys[14], (N, N), jnp.float32)
    sadj_raw = jax.random.uniform(keys[15], (N, N), jnp.float32)
    # row-normalized dense adjacency (spmm in torch is just a matmul semantically)
    adj = adj_raw / jnp.sum(adj_raw, axis=-1, keepdims=True)
    s_adj = sadj_raw / jnp.sum(sadj_raw, axis=-1, keepdims=True)

    fwd = jax.jit(rsgcn_forward, static_argnames=("use_bf16",))
    ref = rsgcn_reference(x, adj, s_adj, params)

    # f32 path: strict correctness check vs. pure-JAX reference.
    out = jax.block_until_ready(fwd(x, adj, s_adj, params))
    np.testing.assert_allclose(np.asarray(out), np.asarray(ref),
                               rtol=1e-5, atol=1e-5)

    # bf16 MXU-operand path (v6e/v7x native); loose sanity check only — the f32
    # path above is the strict semantic check.
    out_bf16 = jax.block_until_ready(fwd(x, adj, s_adj, params, use_bf16=True))
    np.testing.assert_allclose(np.asarray(out_bf16), np.asarray(ref),
                               rtol=1e-1, atol=1e-1)

    print("KERNEL_OK")
</pallas_src>

<mosaic_0001>
module attributes {stable_mosaic.version = 11 : i64} {
  func.func @rsgcn_fused_kernel(%arg0: memref<8x768xf32, #tpu.memory_space<vmem>>, %arg1: memref<8x8xf32, #tpu.memory_space<vmem>>, %arg2: memref<8x8xf32, #tpu.memory_space<vmem>>, %arg3: memref<768x96xf32, #tpu.memory_space<vmem>>, %arg4: memref<1x96xf32, #tpu.memory_space<vmem>>, %arg5: memref<96x3xf32, #tpu.memory_space<vmem>>, %arg6: memref<32x6xf32, #tpu.memory_space<vmem>>, %arg7: memref<1x6xf32, #tpu.memory_space<vmem>>, %arg8: memref<8x2xf32, #tpu.memory_space<vmem>>) attributes {dimension_semantics = [], scalar_prefetch = 0 : i64, scratch_operands = 0 : i64, tpu.core_type = #tpu.core_type<tc>} {
    %c0 = arith.constant 0 : index
    %c0_0 = arith.constant 0 : index
    %0 = vector.load %arg4[%c0, %c0_0] : memref<1x96xf32, #tpu.memory_space<vmem>>, vector<1x96xf32>
    %c0_1 = arith.constant 0 : index
    %c0_2 = arith.constant 0 : index
    %1 = vector.load %arg7[%c0_1, %c0_2] : memref<1x6xf32, #tpu.memory_space<vmem>>, vector<1x6xf32>
    %c0_3 = arith.constant 0 : index
    %c0_4 = arith.constant 0 : index
    %2 = vector.load %arg0[%c0_3, %c0_4] : memref<8x768xf32, #tpu.memory_space<vmem>>, vector<8x768xf32>
    %c0_5 = arith.constant 0 : index
    %c0_6 = arith.constant 0 : index
    %3 = vector.load %arg3[%c0_5, %c0_6] : memref<768x96xf32, #tpu.memory_space<vmem>>, vector<768x96xf32>
    %cst = arith.constant dense<0.000000e+00> : vector<8x96xf32>
    %4 = tpu.matmul %2, %3, %cst {dimension_numbers = #tpu.dot_dimension_numbers<[1], [0], [0], [1], [0, 0, 1, 1], [], []>} : vector<8x768xf32>, vector<768x96xf32>, vector<8x96xf32> -> vector<8x96xf32>
    %c0_7 = arith.constant 0 : index
    %c0_8 = arith.constant 0 : index
    %5 = vector.load %arg1[%c0_7, %c0_8] : memref<8x8xf32, #tpu.memory_space<vmem>>, vector<8x8xf32>
    %6 = vector.extract_strided_slice %4 {offsets = [0, 0], sizes = [8, 32], strides = [1, 1]} : vector<8x96xf32> to vector<8x32xf32>
    %cst_9 = arith.constant dense<0.000000e+00> : vector<8x32xf32>
    %7 = tpu.matmul %5, %6, %cst_9 {dimension_numbers = #tpu.dot_dimension_numbers<[1], [0], [0], [1], [0, 0, 1, 1], [], []>} : vector<8x8xf32>, vector<8x32xf32>, vector<8x32xf32> -> vector<8x32xf32>
    %8 = vector.extract_strided_slice %0 {offsets = [0, 0], sizes = [1, 32], strides = [1, 1]} : vector<1x96xf32> to vector<1x32xf32>
    %9 = vector.broadcast %8 : vector<1x32xf32> to vector<8x32xf32>
    %10 = arith.addf %7, %9 : vector<8x32xf32>
    %c0_10 = arith.constant 0 : index
    %c0_11 = arith.constant 0 : index
    %11 = vector.load %arg2[%c0_10, %c0_11] : memref<8x8xf32, #tpu.memory_space<vmem>>, vector<8x8xf32>
    %12 = vector.extract_strided_slice %4 {offsets = [0, 32], sizes = [8, 32], strides = [1, 1]} : vector<8x96xf32> to vector<8x32xf32>
    %cst_12 = arith.constant dense<0.000000e+00> : vector<8x32xf32>
    %13 = tpu.matmul %11, %12, %cst_12 {dimension_numbers = #tpu.dot_dimension_numbers<[1], [0], [0], [1], [0, 0, 1, 1], [], []>} : vector<8x8xf32>, vector<8x32xf32>, vector<8x32xf32> -> vector<8x32xf32>
    %14 = vector.extract_strided_slice %0 {offsets = [0, 32], sizes = [1, 32], strides = [1, 1]} : vector<1x96xf32> to vector<1x32xf32>
    %15 = vector.broadcast %14 : vector<1x32xf32> to vector<8x32xf32>
    %16 = arith.addf %13, %15 : vector<8x32xf32>
    %17 = vector.extract_strided_slice %4 {offsets = [0, 64], sizes = [8, 32], strides = [1, 1]} : vector<8x96xf32> to vector<8x32xf32>
    %18 = vector.extract_strided_slice %0 {offsets = [0, 64], sizes = [1, 32], strides = [1, 1]} : vector<1x96xf32> to vector<1x32xf32>
    %19 = vector.broadcast %18 : vector<1x32xf32> to vector<8x32xf32>
    %20 = arith.addf %17, %19 : vector<8x32xf32>
    %21 = math.tanh %20 : vector<8x32xf32>
    %22 = tpu.concatenate %10, %16, %21 in 1 : vector<8x32xf32>, vector<8x32xf32>, vector<8x32xf32> -> vector<8x96xf32>
    %c0_13 = arith.constant 0 : index
    %c0_14 = arith.constant 0 : index
    %23 = vector.load %arg5[%c0_13, %c0_14] : memref<96x3xf32, #tpu.memory_space<vmem>>, vector<96x3xf32>
    %cst_15 = arith.constant dense<0.000000e+00> : vector<8x3xf32>
    %24 = tpu.matmul %22, %23, %cst_15 {dimension_numbers = #tpu.dot_dimension_numbers<[1], [0], [0], [1], [0, 0, 1, 1], [], []>} : vector<8x96xf32>, vector<96x3xf32>, vector<8x3xf32> -> vector<8x3xf32>
    %25 = math.absf %24 : vector<8x3xf32>
    %26 = vector.extract_strided_slice %25 {offsets = [0, 0], sizes = [8, 1], strides = [1, 1]} : vector<8x3xf32> to vector<8x1xf32>
    %27 = vector.extract_strided_slice %25 {offsets = [0, 1], sizes = [8, 1], strides = [1, 1]} : vector<8x3xf32> to vector<8x1xf32>
    %28 = vector.extract_strided_slice %25 {offsets = [0, 2], sizes = [8, 1], strides = [1, 1]} : vector<8x3xf32> to vector<8x1xf32>
    %29 = arith.maximumf %26, %27 : vector<8x1xf32>
    %30 = arith.maximumf %29, %28 : vector<8x1xf32>
    %31 = arith.subf %26, %30 : vector<8x1xf32>
    %32 = math.exp %31 : vector<8x1xf32>
    %33 = arith.subf %27, %30 : vector<8x1xf32>
    %34 = math.exp %33 : vector<8x1xf32>
    %35 = arith.subf %28, %30 : vector<8x1xf32>
    %36 = math.exp %35 : vector<8x1xf32>
    %37 = arith.addf %32, %34 : vector<8x1xf32>
    %38 = arith.addf %37, %36 : vector<8x1xf32>
    %39 = tpu.reciprocal %38 : vector<8x1xf32> -> vector<8x1xf32>
    %40 = arith.mulf %32, %39 : vector<8x1xf32>
    %41 = vector.broadcast %40 : vector<8x1xf32> to vector<8x32xf32>
    %42 = arith.mulf %10, %41 : vector<8x32xf32>
    %43 = arith.mulf %34, %39 : vector<8x1xf32>
    %44 = vector.broadcast %43 : vector<8x1xf32> to vector<8x32xf32>
    %45 = arith.mulf %16, %44 : vector<8x32xf32>
    %46 = arith.addf %42, %45 : vector<8x32xf32>
    %47 = arith.mulf %36, %39 : vector<8x1xf32>
    %48 = vector.broadcast %47 : vector<8x1xf32> to vector<8x32xf32>
    %49 = arith.mulf %21, %48 : vector<8x32xf32>
    %50 = arith.addf %46, %49 : vector<8x32xf32>
    %c0_16 = arith.constant 0 : index
    %c0_17 = arith.constant 0 : index
    %51 = vector.load %arg6[%c0_16, %c0_17] : memref<32x6xf32, #tpu.memory_space<vmem>>, vector<32x6xf32>
    %cst_18 = arith.constant dense<0.000000e+00> : vector<8x6xf32>
    %52 = tpu.matmul %50, %51, %cst_18 {dimension_numbers = #tpu.dot_dimension_numbers<[1], [0], [0], [1], [0, 0, 1, 1], [], []>} : vector<8x32xf32>, vector<32x6xf32>, vector<8x6xf32> -> vector<8x6xf32>
    %c0_19 = arith.constant 0 : index
    %c0_20 = arith.constant 0 : index
    %53 = vector.load %arg1[%c0_19, %c0_20] : memref<8x8xf32, #tpu.memory_space<vmem>>, vector<8x8xf32>
    %54 = vector.extract_strided_slice %52 {offsets = [0, 0], sizes = [8, 2], strides = [1, 1]} : vector<8x6xf32> to vector<8x2xf32>
    %cst_21 = arith.constant dense<0.000000e+00> : vector<8x2xf32>
    %55 = tpu.matmul %53, %54, %cst_21 {dimension_numbers = #tpu.dot_dimension_numbers<[1], [0], [0], [1], [0, 0, 1, 1], [], []>} : vector<8x8xf32>, vector<8x2xf32>, vector<8x2xf32> -> vector<8x2xf32>
    %56 = vector.extract_strided_slice %1 {offsets = [0, 0], sizes = [1, 2], strides = [1, 1]} : vector<1x6xf32> to vector<1x2xf32>
    %57 = vector.broadcast %56 : vector<1x2xf32> to vector<8x2xf32>
    %58 = arith.addf %55, %57 : vector<8x2xf32>
    %c0_22 = arith.constant 0 : index
    %c0_23 = arith.constant 0 : index
    %59 = vector.load %arg2[%c0_22, %c0_23] : memref<8x8xf32, #tpu.memory_space<vmem>>, vector<8x8xf32>
    %60 = vector.extract_strided_slice %52 {offsets = [0, 2], sizes = [8, 2], strides = [1, 1]} : vector<8x6xf32> to vector<8x2xf32>
    %cst_24 = arith.constant dense<0.000000e+00> : vector<8x2xf32>
    %61 = tpu.matmul %59, %60, %cst_24 {dimension_numbers = #tpu.dot_dimension_numbers<[1], [0], [0], [1], [0, 0, 1, 1], [], []>} : vector<8x8xf32>, vector<8x2xf32>, vector<8x2xf32> -> vector<8x2xf32>
    %62 = vector.extract_strided_slice %1 {offsets = [0, 2], sizes = [1, 2], strides = [1, 1]} : vector<1x6xf32> to vector<1x2xf32>
    %63 = vector.broadcast %62 : vector<1x2xf32> to vector<8x2xf32>
    %64 = arith.addf %61, %63 : vector<8x2xf32>
    %65 = vector.extract_strided_slice %52 {offsets = [0, 4], sizes = [8, 2], strides = [1, 1]} : vector<8x6xf32> to vector<8x2xf32>
    %66 = vector.extract_strided_slice %1 {offsets = [0, 4], sizes = [1, 2], strides = [1, 1]} : vector<1x6xf32> to vector<1x2xf32>
    %67 = vector.broadcast %66 : vector<1x2xf32> to vector<8x2xf32>
    %68 = arith.addf %65, %67 : vector<8x2xf32>
    %69 = math.tanh %68 : vector<8x2xf32>
    %70 = arith.addf %64, %58 : vector<8x2xf32>
    %71 = arith.addf %70, %69 : vector<8x2xf32>
    %c0_25 = arith.constant 0 : index
    %c0_26 = arith.constant 0 : index
    %72 = vector.load %arg8[%c0_25, %c0_26] : memref<8x2xf32, #tpu.memory_space<vmem>>, vector<8x2xf32>
    tpu.vector_store %arg8[%c0_25, %c0_26], %71 {strides = array<i32>} : memref<8x2xf32, #tpu.memory_space<vmem>>, vector<8x2xf32>,
    return
  }
}

</mosaic_0001>

<llo_original>
// kernel: rsgcn_forward.1
$region0: #{rsgcn_forward.1}
  #allocation0 [shape = 'u32[]', space=smem, size = 0x4, offset = 0x4, fixed_abs, tag = 'smem constant byte address 0x4 - core index']
  #allocation1 [shape = 'u32[144,128]{1,0:T(1,128)}', space=vmem, size = 0x12000, scoped, tag = 'internal scratch']
  %s0 = inlined_call_operand.vmem [shape: f32[8,768], index: 0, kind: input, shape index: {}]
  %s1 = inlined_call_operand.vmem [shape: f32[8,8], index: 1, kind: input, shape index: {}]
  %s2 = inlined_call_operand.vmem [shape: f32[8,8], index: 2, kind: input, shape index: {}]
  %s3 = inlined_call_operand.vmem [shape: f32[768,96], index: 3, kind: input, shape index: {}]
  %s4 = inlined_call_operand.vmem [shape: f32[1,96], index: 4, kind: input, shape index: {}]
  %s5 = inlined_call_operand.vmem [shape: f32[96,3], index: 5, kind: input, shape index: {}]
  %s6 = inlined_call_operand.vmem [shape: f32[32,6], index: 6, kind: input, shape index: {}]
  %s7 = inlined_call_operand.vmem [shape: f32[1,6], index: 7, kind: input, shape index: {}]
  %s8 = inlined_call_operand.vmem [shape: f32[8,2], index: 8, kind: output, shape index: {}]
  %s9 = sld [smem:[#allocation0]]
  $region42: #{rsgcn_forward.1} parent=0
    _
  %s11 = ssub.s32 1, %s9
  %s12 = scalar_select 0, %s11, %s9
  // Predicated region
  $region2: #{rsgcn_forward.1} parent=0 // pred_check
    _
  $region3: #{rsgcn_forward.1} parent=0 // pred_check_branch
    %14 = sbr.rel (0) target = $region5
  $region4: #{rsgcn_forward.1} parent=0 // pred_region
    _
  $region5: #{rsgcn_forward.1} parent=0 // pred_fallthru
    _
  // Predicated region
  $region6: #{rsgcn_forward.1} parent=0 // pred_check
    _
  $region7: #{rsgcn_forward.1} parent=0 // pred_check_branch
    %16 = sbr.rel (0) target = $region9
  $region8: #{rsgcn_forward.1} parent=0 // pred_region
    _
  $region9: #{rsgcn_forward.1} parent=0 // pred_fallthru
    _
  // Predicated region
  $region10: #{rsgcn_forward.1} parent=0 // pred_check
    _
  $region11: #{rsgcn_forward.1} parent=0 // pred_check_branch
    %18 = sbr.rel (0) target = $region13
  $region12: #{rsgcn_forward.1} parent=0 // pred_region
    _
  $region13: #{rsgcn_forward.1} parent=0 // pred_fallthru
    _
  // Predicated region
  $region14: #{rsgcn_forward.1} parent=0 // pred_check
    _
  $region15: #{rsgcn_forward.1} parent=0 // pred_check_branch
    %20 = sbr.rel (0) target = $region17
  $region16: #{rsgcn_forward.1} parent=0 // pred_region
    _
  $region17: #{rsgcn_forward.1} parent=0 // pred_fallthru
    _
  // Predicated region
  $region18: #{rsgcn_forward.1} parent=0 // pred_check
    _
  $region19: #{rsgcn_forward.1} parent=0 // pred_check_branch
    %22 = sbr.rel (0) target = $region21
  $region20: #{rsgcn_forward.1} parent=0 // pred_region
    _
  $region21: #{rsgcn_forward.1} parent=0 // pred_fallthru
    _
  // Predicated region
  $region22: #{rsgcn_forward.1} parent=0 // pred_check
    _
  $region23: #{rsgcn_forward.1} parent=0 // pred_check_branch
    %24 = sbr.rel (0) target = $region25
  $region24: #{rsgcn_forward.1} parent=0 // pred_region
    _
  $region25: #{rsgcn_forward.1} parent=0 // pred_fallthru
    _
  // Predicated region
  $region26: #{rsgcn_forward.1} parent=0 // pred_check
    _
  $region27: #{rsgcn_forward.1} parent=0 // pred_check_branch
    %26 = sbr.rel (0) target = $region29
  $region28: #{rsgcn_forward.1} parent=0 // pred_region
    _
  $region29: #{rsgcn_forward.1} parent=0 // pred_fallthru
    _
  // Predicated region
  $region30: #{rsgcn_forward.1} parent=0 // pred_check
    _
  $region31: #{rsgcn_forward.1} parent=0 // pred_check_branch
    %28 = sbr.rel (0) target = $region33
  $region32: #{rsgcn_forward.1} parent=0 // pred_region
    _
  $region33: #{rsgcn_forward.1} parent=0 // pred_fallthru
    _
  %v29 = vld [vmem:[%s4] sm:$0x1]
  %v30 = vld [vmem:[%s7] sm:$0x1]
  %v31 = vld [vmem:[%s0] sm:$0xff]
  %v32 = vld [vmem:[%s0 + $0x8] sm:$0xff]
  %v33 = vld [vmem:[%s0 + $0x10] sm:$0xff]
  %v34 = vld [vmem:[%s0 + $0x18] sm:$0xff]
  %v35 = vld [vmem:[%s0 + $0x20] sm:$0xff]
  %v36 = vld [vmem:[%s0 + $0x28] sm:$0xff]
  %v37 = vld [vmem:[%s3] sm:$0xff]
  %v38 = vld [vmem:[%s3 + $0x8] sm:$0xff]
  %v39 = vld [vmem:[%s3 + $0x10] sm:$0xff]
  %v40 = vld [vmem:[%s3 + $0x18] sm:$0xff]
  %v41 = vld [vmem:[%s3 + $0x20] sm:$0xff]
  %v42 = vld [vmem:[%s3 + $0x28] sm:$0xff]
  %v43 = vld [vmem:[%s3 + $0x30] sm:$0xff]
  %v44 = vld [vmem:[%s3 + $0x38] sm:$0xff]
  %v45 = vld [vmem:[%s3 + $0x40] sm:$0xff]
  %v46 = vld [vmem:[%s3 + $0x48] sm:$0xff]
  %v47 = vld [vmem:[%s3 + $0x50] sm:$0xff]
  %v48 = vld [vmem:[%s3 + $0x58] sm:$0xff]
  %v49 = vld [vmem:[%s3 + $0x60] sm:$0xff]
  %v50 = vld [vmem:[%s3 + $0x68] sm:$0xff]
  %v51 = vld [vmem:[%s3 + $0x70] sm:$0xff]
  %v52 = vld [vmem:[%s3 + $0x78] sm:$0xff]
  %v53 = vld [vmem:[%s3 + $0x80] sm:$0xff]
  %v54 = vld [vmem:[%s3 + $0x88] sm:$0xff]
  %v55 = vld [vmem:[%s3 + $0x90] sm:$0xff]
  %v56 = vld [vmem:[%s3 + $0x98] sm:$0xff]
  %v57 = vld [vmem:[%s3 + $0xa0] sm:$0xff]
  %v58 = vld [vmem:[%s3 + $0xa8] sm:$0xff]
  %v59 = vld [vmem:[%s3 + $0xb0] sm:$0xff]
  %v60 = vld [vmem:[%s3 + $0xb8] sm:$0xff]
  %v61 = vld [vmem:[%s3 + $0xc0] sm:$0xff]
  %v62 = vld [vmem:[%s3 + $0xc8] sm:$0xff]
  %v63 = vld [vmem:[%s3 + $0xd0] sm:$0xff]
  %v64 = vld [vmem:[%s3 + $0xd8] sm:$0xff]
  %v65 = vld [vmem:[%s3 + $0xe0] sm:$0xff]
  %v66 = vld [vmem:[%s3 + $0xe8] sm:$0xff]
  %v67 = vld [vmem:[%s3 + $0xf0] sm:$0xff]
  %v68 = vld [vmem:[%s3 + $0xf8] sm:$0xff]
  %v69 = vld [vmem:[%s3 + $0x100] sm:$0xff]
  %v70 = vld [vmem:[%s3 + $0x108] sm:$0xff]
  %v71 = vld [vmem:[%s3 + $0x110] sm:$0xff]
  %v72 = vld [vmem:[%s3 + $0x118] sm:$0xff]
  %v73 = vld [vmem:[%s3 + $0x120] sm:$0xff]
  %v74 = vld [vmem:[%s3 + $0x128] sm:$0xff]
  %v75 = vld [vmem:[%s3 + $0x130] sm:$0xff]
  %v76 = vld [vmem:[%s3 + $0x138] sm:$0xff]
  %v77 = vld [vmem:[%s3 + $0x140] sm:$0xff]
  %v78 = vld [vmem:[%s3 + $0x148] sm:$0xff]
  %v79 = vld [vmem:[%s3 + $0x150] sm:$0xff]
  %v80 = vld [vmem:[%s3 + $0x158] sm:$0xff]
  %v81 = vld [vmem:[%s3 + $0x160] sm:$0xff]
  %v82 = vld [vmem:[%s3 + $0x168] sm:$0xff]
  %v83 = vld [vmem:[%s3 + $0x170] sm:$0xff]
  %v84 = vld [vmem:[%s3 + $0x178] sm:$0xff]
  %v85 = vld [vmem:[%s3 + $0x180] sm:$0xff]
  %v86 = vld [vmem:[%s3 + $0x188] sm:$0xff]
  %v87 = vld [vmem:[%s3 + $0x190] sm:$0xff]
  %v88 = vld [vmem:[%s3 + $0x198] sm:$0xff]
  %v89 = vld [vmem:[%s3 + $0x1a0] sm:$0xff]
  %v90 = vld [vmem:[%s3 + $0x1a8] sm:$0xff]
  %v91 = vld [vmem:[%s3 + $0x1b0] sm:$0xff]
  %v92 = vld [vmem:[%s3 + $0x1b8] sm:$0xff]
  %v93 = vld [vmem:[%s3 + $0x1c0] sm:$0xff]
  %v94 = vld [vmem:[%s3 + $0x1c8] sm:$0xff]
  %v95 = vld [vmem:[%s3 + $0x1d0] sm:$0xff]
  %v96 = vld [vmem:[%s3 + $0x1d8] sm:$0xff]
  %v97 = vld [vmem:[%s3 + $0x1e0] sm:$0xff]
  %v98 = vld [vmem:[%s3 + $0x1e8] sm:$0xff]
  %v99 = vld [vmem:[%s3 + $0x1f0] sm:$0xff]
  %v100 = vld [vmem:[%s3 + $0x1f8] sm:$0xff]
  %v101 = vld [vmem:[%s3 + $0x200] sm:$0xff]
  %v102 = vld [vmem:[%s3 + $0x208] sm:$0xff]
  %v103 = vld [vmem:[%s3 + $0x210] sm:$0xff]
  %v104 = vld [vmem:[%s3 + $0x218] sm:$0xff]
  %v105 = vld [vmem:[%s3 + $0x220] sm:$0xff]
  %v106 = vld [vmem:[%s3 + $0x228] sm:$0xff]
  %v107 = vld [vmem:[%s3 + $0x230] sm:$0xff]
  %v108 = vld [vmem:[%s3 + $0x238] sm:$0xff]
  %v109 = vld [vmem:[%s3 + $0x240] sm:$0xff]
  %v110 = vld [vmem:[%s3 + $0x248] sm:$0xff]
  %v111 = vld [vmem:[%s3 + $0x250] sm:$0xff]
  %v112 = vld [vmem:[%s3 + $0x258] sm:$0xff]
  %v113 = vld [vmem:[%s3 + $0x260] sm:$0xff]
  %v114 = vld [vmem:[%s3 + $0x268] sm:$0xff]
  %v115 = vld [vmem:[%s3 + $0x270] sm:$0xff]
  %v116 = vld [vmem:[%s3 + $0x278] sm:$0xff]
  %v117 = vld [vmem:[%s3 + $0x280] sm:$0xff]
  %v118 = vld [vmem:[%s3 + $0x288] sm:$0xff]
  %v119 = vld [vmem:[%s3 + $0x290] sm:$0xff]
  %v120 = vld [vmem:[%s3 + $0x298] sm:$0xff]
  %v121 = vld [vmem:[%s3 + $0x2a0] sm:$0xff]
  %v122 = vld [vmem:[%s3 + $0x2a8] sm:$0xff]
  %v123 = vld [vmem:[%s3 + $0x2b0] sm:$0xff]
  %v124 = vld [vmem:[%s3 + $0x2b8] sm:$0xff]
  %v125 = vld [vmem:[%s3 + $0x2c0] sm:$0xff]
  %v126 = vld [vmem:[%s3 + $0x2c8] sm:$0xff]
  %v127 = vld [vmem:[%s3 + $0x2d0] sm:$0xff]
  %v128 = vld [vmem:[%s3 + $0x2d8] sm:$0xff]
  %v129 = vld [vmem:[%s3 + $0x2e0] sm:$0xff]
  %v130 = vld [vmem:[%s3 + $0x2e8] sm:$0xff]
  %v131 = vld [vmem:[%s3 + $0x2f0] sm:$0xff]
  %v132 = vld [vmem:[%s3 + $0x2f8] sm:$0xff]
  %133 = vmatprep.subr.mxu0 0.0
  %134 = vmatpush1.msra.mxu0 %v37
  %135 = vmatprep.subr.mxu0 0.0
  %136 = vmatpush1.msra.mxu0 %v38
  %137 = vmatprep.subr.mxu0 0.0
  %138 = vmatpush1.msra.mxu0 %v39
  %139 = vmatprep.subr.mxu0 0.0
  %140 = vmatpush1.msra.mxu0 %v40
  %141 = vmatprep.subr.mxu0 0.0
  %142 = vmatpush1.msra.mxu0 %v41
  %143 = vmatprep.subr.mxu0 0.0
  %144 = vmatpush1.msra.mxu0 %v42
  %145 = vmatprep.subr.mxu0 0.0
  %146 = vmatpush1.msra.mxu0 %v43
  %147 = vmatprep.subr.mxu0 0.0
  %148 = vmatpush1.msra.mxu0 %v44
  %149 = vmatprep.subr.mxu0 0.0
  %150 = vmatpush1.msra.mxu0 %v45
  %151 = vmatprep.subr.mxu0 0.0
  %152 = vmatpush1.msra.mxu0 %v46
  %153 = vmatprep.subr.mxu0 0.0
  %154 = vmatpush1.msra.mxu0 %v47
  %155 = vmatprep.subr.mxu0 0.0
  %156 = vmatpush1.msra.mxu0 %v48
  %157 = vmatprep.subr.mxu0 0.0
  %158 = vmatpush1.msra.mxu0 %v49
  %159 = vmatprep.subr.mxu0 0.0
  %160 = vmatpush1.msra.mxu0 %v50
  %161 = vmatprep.subr.mxu0 0.0
  %162 = vmatpush1.msra.mxu0 %v51
  %163 = vmatprep.subr.mxu0 0.0
  %164 = vmatpush1.msra.mxu0 %v52
  %165 = vmatprep.subr.mxu0 0.0
  %166 = vmatpush1.msra.mxu0 %v53
  %167 = vmatprep.subr.mxu0 0.0
  %168 = vmatpush1.msra.mxu0 %v54
  %169 = vmatprep.subr.mxu0 0.0
  %170 = vmatpush1.msra.mxu0 %v55
  %171 = vmatprep.subr.mxu0 0.0
  %172 = vmatpush1.msra.mxu0 %v56
  %173 = vmatprep.subr.mxu0 0.0
  %174 = vmatpush1.msra.mxu0 %v57
  %175 = vmatprep.subr.mxu0 0.0
  %176 = vmatpush1.msra.mxu0 %v58
  %177 = vmatprep.subr.mxu0 0.0
  %178 = vmatpush1.msra.mxu0 %v59
  %179 = vmatprep.subr.mxu0 0.0
  %180 = vmatpush1.msra.mxu0 %v60
  %181 = vmatprep.subr.mxu0 0.0
  %182 = vmatpush1.msra.mxu0 %v61
  %183 = vmatprep.subr.mxu0 0.0
  %184 = vmatpush1.msra.mxu0 %v62
  %185 = vmatprep.subr.mxu0 0.0
  %186 = vmatpush1.msra.mxu0 %v63
  %187 = vmatprep.subr.mxu0 0.0
  %188 = vmatpush1.msra.mxu0 %v64
  %189 = vmatprep.subr.mxu0 0.0
  %190 = vmatpush1.msra.mxu0 %v65
  %191 = vmatprep.subr.mxu0 0.0
  %192 = vmatpush1.msra.mxu0 %v66
  %193 = vmatprep.subr.mxu0 0.0
  %194 = vmatpush1.msra.mxu0 %v67
  %195 = vmatprep.subr.mxu0 0.0
  %196 = vmatpush1.msra.mxu0 %v68
  %197 = vmatprep.mubr.f32.mxu0 %v32
  %198 = vmatmul.mubr.f32.gmra.mrb[0].mxu0 %v31
  %v199 = vpop.f32.mrb[0].mxu0
  %v200 = vadd.f32 0.0, %v199
  %v201 = vpop.f32.mrb[0].mxu0
  %202 = vdwg.mxu0
  %203 = vmatprep.subr.mxu0 0.0
  %204 = vmatpush1.msra.mxu0 %v69
  %205 = vmatprep.subr.mxu0 0.0
  %206 = vmatpush1.msra.mxu0 %v70
  %207 = vmatprep.subr.mxu0 0.0
  %208 = vmatpush1.msra.mxu0 %v71
  %209 = vmatprep.subr.mxu0 0.0
  %210 = vmatpush1.msra.mxu0 %v72
  %211 = vmatprep.subr.mxu0 0.0
  %212 = vmatpush1.msra.mxu0 %v73
  %213 = vmatprep.subr.mxu0 0.0
  %214 = vmatpush1.msra.mxu0 %v74
  %215 = vmatprep.subr.mxu0 0.0
  %216 = vmatpush1.msra.mxu0 %v75
  %217 = vmatprep.subr.mxu0 0.0
  %218 = vmatpush1.msra.mxu0 %v76
  %219 = vmatprep.subr.mxu0 0.0
  %220 = vmatpush1.msra.mxu0 %v77
  %221 = vmatprep.subr.mxu0 0.0
  %222 = vmatpush1.msra.mxu0 %v78
  %223 = vmatprep.subr.mxu0 0.0
  %224 = vmatpush1.msra.mxu0 %v79
  %225 = vmatprep.subr.mxu0 0.0
  %226 = vmatpush1.msra.mxu0 %v80
  %227 = vmatprep.subr.mxu0 0.0
  %228 = vmatpush1.msra.mxu0 %v81
  %229 = vmatprep.subr.mxu0 0.0
  %230 = vmatpush1.msra.mxu0 %v82
  %231 = vmatprep.subr.mxu0 0.0
  %232 = vmatpush1.msra.mxu0 %v83
  %233 = vmatprep.subr.mxu0 0.0
  %234 = vmatpush1.msra.mxu0 %v84
  %235 = vmatprep.subr.mxu0 0.0
  %236 = vmatpush1.msra.mxu0 %v85
  %237 = vmatprep.subr.mxu0 0.0
  %238 = vmatpush1.msra.mxu0 %v86
  %239 = vmatprep.subr.mxu0 0.0
  %240 = vmatpush1.msra.mxu0 %v87
  %241 = vmatprep.subr.mxu0 0.0
  %242 = vmatpush1.msra.mxu0 %v88
  %243 = vmatprep.subr.mxu0 0.0
  %244 = vmatpush1.msra.mxu0 %v89
  %245 = vmatprep.subr.mxu0 0.0
  %246 = vmatpush1.msra.mxu0 %v90
  %247 = vmatprep.subr.mxu0 0.0
  %248 = vmatpush1.msra.mxu0 %v91
  %249 = vmatprep.subr.mxu0 0.0
  %250 = vmatpush1.msra.mxu0 %v92
  %251 = vmatprep.subr.mxu0 0.0
  %252 = vmatpush1.msra.mxu0 %v93
  %253 = vmatprep.subr.mxu0 0.0
  %254 = vmatpush1.msra.mxu0 %v94
  %255 = vmatprep.subr.mxu0 0.0
  %256 = vmatpush1.msra.mxu0 %v95
  %257 = vmatprep.subr.mxu0 0.0
  %258 = vmatpush1.msra.mxu0 %v96
  %259 = vmatprep.subr.mxu0 0.0
  %260 = vmatpush1.msra.mxu0 %v97
  %261 = vmatprep.subr.mxu0 0.0
  %262 = vmatpush1.msra.mxu0 %v98
  %263 = vmatprep.subr.mxu0 0.0
  %264 = vmatpush1.msra.mxu0 %v99
  %265 = vmatprep.subr.mxu0 0.0
  %266 = vmatpush1.msra.mxu0 %v100
  %267 = vmatprep.mubr.f32.mxu0 %v34
  %268 = vmatmul.mubr.f32.gmra.mrb[0].mxu0 %v33
  %v269 = vpop.f32.mrb[0].mxu0
  %v270 = vadd.f32 %v200, %v269
  %v271 = vpop.f32.mrb[0].mxu0
  %272 = vdwg.mxu0
  %273 = vmatprep.subr.mxu0 0.0
  %274 = vmatpush1.msra.mxu0 %v101
  %275 = vmatprep.subr.mxu0 0.0
  %276 = vmatpush1.msra.mxu0 %v102
  %277 = vmatprep.subr.mxu0 0.0
  %278 = vmatpush1.msra.mxu0 %v103
  %279 = vmatprep.subr.mxu0 0.0
  %280 = vmatpush1.msra.mxu0 %v104
  %281 = vmatprep.subr.mxu0 0.0
  %282 = vmatpush1.msra.mxu0 %v105
  %283 = vmatprep.subr.mxu0 0.0
  %284 = vmatpush1.msra.mxu0 %v106
  %285 = vmatprep.subr.mxu0 0.0
  %286 = vmatpush1.msra.mxu0 %v107
  %287 = vmatprep.subr.mxu0 0.0
  %288 = vmatpush1.msra.mxu0 %v108
  %289 = vmatprep.subr.mxu0 0.0
  %290 = vmatpush1.msra.mxu0 %v109
  %291 = vmatprep.subr.mxu0 0.0
  %292 = vmatpush1.msra.mxu0 %v110
  %293 = vmatprep.subr.mxu0 0.0
  %294 = vmatpush1.msra.mxu0 %v111
  %295 = vmatprep.subr.mxu0 0.0
  %296 = vmatpush1.msra.mxu0 %v112
  %297 = vmatprep.subr.mxu0 0.0
  %298 = vmatpush1.msra.mxu0 %v113
  %299 = vmatprep.subr.mxu0 0.0
  %300 = vmatpush1.msra.mxu0 %v114
  %301 = vmatprep.subr.mxu0 0.0
  %302 = vmatpush1.msra.mxu0 %v115
  %303 = vmatprep.subr.mxu0 0.0
  %304 = vmatpush1.msra.mxu0 %v116
  %305 = vmatprep.subr.mxu0 0.0
  %306 = vmatpush1.msra.mxu0 %v117
  %307 = vmatprep.subr.mxu0 0.0
  %308 = vmatpush1.msra.mxu0 %v118
  %309 = vmatprep.subr.mxu0 0.0
  %310 = vmatpush1.msra.mxu0 %v119
  %311 = vmatprep.subr.mxu0 0.0
  %312 = vmatpush1.msra.mxu0 %v120
  %313 = vmatprep.subr.mxu0 0.0
  %314 = vmatpush1.msra.mxu0 %v121
  %315 = vmatprep.subr.mxu0 0.0
  %316 = vmatpush1.msra.mxu0 %v122
  %317 = vmatprep.subr.mxu0 0.0
  %318 = vmatpush1.msra.mxu0 %v123
  %319 = vmatprep.subr.mxu0 0.0
  %320 = vmatpush1.msra.mxu0 %v124
  %321 = vmatprep.subr.mxu0 0.0
  %322 = vmatpush1.msra.mxu0 %v125
  %323 = vmatprep.subr.mxu0 0.0
  %324 = vmatpush1.msra.mxu0 %v126
  %325 = vmatprep.subr.mxu0 0.0
  %326 = vmatpush1.msra.mxu0 %v127
  %327 = vmatprep.subr.mxu0 0.0
  %328 = vmatpush1.msra.mxu0 %v128
  %329 = vmatprep.subr.mxu0 0.0
  %330 = vmatpush1.msra.mxu0 %v129
  %331 = vmatprep.subr.mxu0 0.0
  %332 = vmatpush1.msra.mxu0 %v130
  %333 = vmatprep.subr.mxu0 0.0
  %334 = vmatpush1.msra.mxu0 %v131
  %335 = vmatprep.subr.mxu0 0.0
  %336 = vmatpush1.msra.mxu0 %v132
  %337 = vmatprep.mubr.f32.mxu0 %v36
  %338 = vmatmul.mubr.f32.gmra.mrb[0].mxu0 %v35
  %v339 = vpop.f32.mrb[0].mxu0
  %v340 = vadd.f32 %v270, %v339
  %v341 = vpop.f32.mrb[0].mxu0
  %342 = vdwg.mxu0
  %v343 = vld [vmem:[%s1] sm:$0xff]
  %v345 = vlaneseq
  %v346 = vshrl.u32 %v345, 7
  %v347 = vsub.s32 0, %v346
  %v348 = vrot.slane %v29, %v347
  %vm350 = vcmask 64512
  %v352 = vsel %vm350, %v343, 0
  %354 = vmatprep.subr.mxu0 0.0
  %355 = vmatpush1.msra.mxu0 %v340
  %356 = vmatprep.subr.mxu0 0.0
  %357 = vmatpush1.msra.mxu0 0.0
  %358 = vmatprep.subr.mxu0 0.0
  %359 = vmatpush1.msra.mxu0 0.0
  %360 = vmatprep.subr.mxu0 0.0
  %361 = vmatpush1.msra.mxu0 0.0
  %362 = vmatprep.subr.mxu0 0.0
  %363 = vmatpush1.msra.mxu0 0.0
  %364 = vmatprep.subr.mxu0 0.0
  %365 = vmatpush1.msra.mxu0 0.0
  %366 = vmatprep.subr.mxu0 0.0
  %367 = vmatpush1.msra.mxu0 0.0
  %368 = vmatprep.subr.mxu0 0.0
  %369 = vmatpush1.msra.mxu0 0.0
  %370 = vmatprep.subr.mxu0 0.0
  %371 = vmatpush1.msra.mxu0 0.0
  %372 = vmatprep.subr.mxu0 0.0
  %373 = vmatpush1.msra.mxu0 0.0
  %374 = vmatprep.subr.mxu0 0.0
  %375 = vmatpush1.msra.mxu0 0.0
  %376 = vmatprep.subr.mxu0 0.0
  %377 = vmatpush1.msra.mxu0 0.0
  %378 = vmatprep.subr.mxu0 0.0
  %379 = vmatpush1.msra.mxu0 0.0
  %380 = vmatprep.subr.mxu0 0.0
  %381 = vmatpush1.msra.mxu0 0.0
  %382 = vmatprep.subr.mxu0 0.0
  %383 = vmatpush1.msra.mxu0 0.0
  %384 = vmatprep.subr.mxu0 0.0
  %385 = vmatpush1.msra.mxu0 0.0
  %386 = vmatprep.subr.mxu0 0.0
  %387 = vmatpush1.msra.mxu0 0.0
  %388 = vmatprep.subr.mxu0 0.0
  %389 = vmatpush1.msra.mxu0 0.0
  %390 = vmatprep.subr.mxu0 0.0
  %391 = vmatpush1.msra.mxu0 0.0
  %392 = vmatprep.subr.mxu0 0.0
  %393 = vmatpush1.msra.mxu0 0.0
  %394 = vmatprep.subr.mxu0 0.0
  %395 = vmatpush1.msra.mxu0 0.0
  %396 = vmatprep.subr.mxu0 0.0
  %397 = vmatpush1.msra.mxu0 0.0
  %398 = vmatprep.subr.mxu0 0.0
  %399 = vmatpush1.msra.mxu0 0.0
  %400 = vmatprep.subr.mxu0 0.0
  %401 = vmatpush1.msra.mxu0 0.0
  %402 = vmatprep.subr.mxu0 0.0
  %403 = vmatpush1.msra.mxu0 0.0
  %404 = vmatprep.subr.mxu0 0.0
  %405 = vmatpush1.msra.mxu0 0.0
  %406 = vmatprep.subr.mxu0 0.0
  %407 = vmatpush1.msra.mxu0 0.0
  %408 = vmatprep.subr.mxu0 0.0
  %409 = vmatpush1.msra.mxu0 0.0
  %410 = vmatprep.subr.mxu0 0.0
  %411 = vmatpush1.msra.mxu0 0.0
  %412 = vmatprep.subr.mxu0 0.0
  %413 = vmatpush1.msra.mxu0 0.0
  %414 = vmatprep.subr.mxu0 0.0
  %415 = vmatpush1.msra.mxu0 0.0
  %416 = vmatprep.subr.mxu0 0.0
  %417 = vmatpush1.msra.mxu0 0.0
  %418 = vmatprep.mubr.f32.mxu0 0.0
  %419 = vmatmul.mubr.f32.gmra.mrb[0].mxu0 %v352
  %v420 = vpop.f32.mrb[0].mxu0
  %v421 = vadd.f32 %v348, %v420
  %v422 = vpop.f32.mrb[0].mxu0
  %423 = vdwg.mxu0
  %v424 = vld [vmem:[%s2] sm:$0xff]
  %426 = vrot.lane.b32.xlu0 %v340, 96
  %v427 = vpop.permute.xlu0 %426
  %429 = vrot.lane.b32.xlu0 %v348, 96
  %v430 = vpop.permute.xlu0 %429
  %v433 = vsel %vm350, %v424, 0
  %435 = vmatprep.subr.mxu0 0.0
  %436 = vmatpush1.msra.mxu0 %v427
  %437 = vmatprep.subr.mxu0 0.0
  %438 = vmatpush1.msra.mxu0 0.0
  %439 = vmatprep.subr.mxu0 0.0
  %440 = vmatpush1.msra.mxu0 0.0
  %441 = vmatprep.subr.mxu0 0.0
  %442 = vmatpush1.msra.mxu0 0.0
  %443 = vmatprep.subr.mxu0 0.0
  %444 = vmatpush1.msra.mxu0 0.0
  %445 = vmatprep.subr.mxu0 0.0
  %446 = vmatpush1.msra.mxu0 0.0
  %447 = vmatprep.subr.mxu0 0.0
  %448 = vmatpush1.msra.mxu0 0.0
  %449 = vmatprep.subr.mxu0 0.0
  %450 = vmatpush1.msra.mxu0 0.0
  %451 = vmatprep.subr.mxu0 0.0
  %452 = vmatpush1.msra.mxu0 0.0
  %453 = vmatprep.subr.mxu0 0.0
  %454 = vmatpush1.msra.mxu0 0.0
  %455 = vmatprep.subr.mxu0 0.0
  %456 = vmatpush1.msra.mxu0 0.0
  %457 = vmatprep.subr.mxu0 0.0
  %458 = vmatpush1.msra.mxu0 0.0
  %459 = vmatprep.subr.mxu0 0.0
  %460 = vmatpush1.msra.mxu0 0.0
  %461 = vmatprep.subr.mxu0 0.0
  %462 = vmatpush1.msra.mxu0 0.0
  %463 = vmatprep.subr.mxu0 0.0
  %464 = vmatpush1.msra.mxu0 0.0
  %465 = vmatprep.subr.mxu0 0.0
  %466 = vmatpush1.msra.mxu0 0.0
  %467 = vmatprep.subr.mxu0 0.0
  %468 = vmatpush1.msra.mxu0 0.0
  %469 = vmatprep.subr.mxu0 0.0
  %470 = vmatpush1.msra.mxu0 0.0
  %471 = vmatprep.subr.mxu0 0.0
  %472 = vmatpush1.msra.mxu0 0.0
  %473 = vmatprep.subr.mxu0 0.0
  %474 = vmatpush1.msra.mxu0 0.0
  %475 = vmatprep.subr.mxu0 0.0
  %476 = vmatpush1.msra.mxu0 0.0
  %477 = vmatprep.subr.mxu0 0.0
  %478 = vmatpush1.msra.mxu0 0.0
  %479 = vmatprep.subr.mxu0 0.0
  %480 = vmatpush1.msra.mxu0 0.0
  %481 = vmatprep.subr.mxu0 0.0
  %482 = vmatpush1.msra.mxu0 0.0
  %483 = vmatprep.subr.mxu0 0.0
  %484 = vmatpush1.msra.mxu0 0.0
  %485 = vmatprep.subr.mxu0 0.0
  %486 = vmatpush1.msra.mxu0 0.0
  %487 = vmatprep.subr.mxu0 0.0
  %488 = vmatpush1.msra.mxu0 0.0
  %489 = vmatprep.subr.mxu0 0.0
  %490 = vmatpush1.msra.mxu0 0.0
  %491 = vmatprep.subr.mxu0 0.0
  %492 = vmatpush1.msra.mxu0 0.0
  %493 = vmatprep.subr.mxu0 0.0
  %494 = vmatpush1.msra.mxu0 0.0
  %495 = vmatprep.subr.mxu0 0.0
  %496 = vmatpush1.msra.mxu0 0.0
  %497 = vmatprep.subr.mxu0 0.0
  %498 = vmatpush1.msra.mxu0 0.0
  %499 = vmatprep.mubr.f32.mxu0 0.0
  %500 = vmatmul.mubr.f32.gmra.mrb[0].mxu0 %v433
  %v501 = vpop.f32.mrb[0].mxu0
  %v502 = vadd.f32 %v430, %v501
  %v503 = vpop.f32.mrb[0].mxu0
  %504 = vdwg.mxu0
  %v505 = vadd.f32 %v340, %v348
  %v506 = vtanh.pop %v505
  %508 = vrot.lane.b32.xlu0 %v502, 32
  %v509 = vpop.permute.xlu0 %508
  %vm511 = vcmask 261120
  %v512 = vsel %vm511, %v421, %v509
  %vm513 = vcmask 523264
  %v514 = vsel %vm513, %v512, %v506
  %v515 = vld [vmem:[%s5] sm:$0xff]
  %v516 = vld [vmem:[%s5 + $0x8] sm:$0xff]
  %v517 = vld [vmem:[%s5 + $0x10] sm:$0xff]
  %v518 = vld [vmem:[%s5 + $0x18] sm:$0xff]
  %v519 = vld [vmem:[%s5 + $0x20] sm:$0xff]
  %v520 = vld [vmem:[%s5 + $0x28] sm:$0xff]
  %v521 = vld [vmem:[%s5 + $0x30] sm:$0xff]
  %v522 = vld [vmem:[%s5 + $0x38] sm:$0xff]
  %v523 = vld [vmem:[%s5 + $0x40] sm:$0xff]
  %v524 = vld [vmem:[%s5 + $0x48] sm:$0xff]
  %v525 = vld [vmem:[%s5 + $0x50] sm:$0xff]
  %v526 = vld [vmem:[%s5 + $0x58] sm:$0xff]
  %vm527 = vcmask 785408
  %v529 = vsel %vm527, %v514, 0
  %531 = vmatprep.subr.mxu0 0.0
  %532 = vmatpush1.msra.mxu0 %v515
  %533 = vmatprep.subr.mxu0 0.0
  %534 = vmatpush1.msra.mxu0 %v516
  %535 = vmatprep.subr.mxu0 0.0
  %536 = vmatpush1.msra.mxu0 %v517
  %537 = vmatprep.subr.mxu0 0.0
  %538 = vmatpush1.msra.mxu0 %v518
  %539 = vmatprep.subr.mxu0 0.0
  %540 = vmatpush1.msra.mxu0 %v519
  %541 = vmatprep.subr.mxu0 0.0
  %542 = vmatpush1.msra.mxu0 %v520
  %543 = vmatprep.subr.mxu0 0.0
  %544 = vmatpush1.msra.mxu0 %v521
  %545 = vmatprep.subr.mxu0 0.0
  %546 = vmatpush1.msra.mxu0 %v522
  %547 = vmatprep.subr.mxu0 0.0
  %548 = vmatpush1.msra.mxu0 %v523
  %549 = vmatprep.subr.mxu0 0.0
  %550 = vmatpush1.msra.mxu0 %v524
  %551 = vmatprep.subr.mxu0 0.0
  %552 = vmatpush1.msra.mxu0 %v525
  %553 = vmatprep.subr.mxu0 0.0
  %554 = vmatpush1.msra.mxu0 %v526
  %555 = vmatprep.subr.mxu0 0.0
  %556 = vmatpush1.msra.mxu0 0.0
  %557 = vmatprep.subr.mxu0 0.0
  %558 = vmatpush1.msra.mxu0 0.0
  %559 = vmatprep.subr.mxu0 0.0
  %560 = vmatpush1.msra.mxu0 0.0
  %561 = vmatprep.subr.mxu0 0.0
  %562 = vmatpush1.msra.mxu0 0.0
  %563 = vmatprep.subr.mxu0 0.0
  %564 = vmatpush1.msra.mxu0 0.0
  %565 = vmatprep.subr.mxu0 0.0
  %566 = vmatpush1.msra.mxu0 0.0
  %567 = vmatprep.subr.mxu0 0.0
  %568 = vmatpush1.msra.mxu0 0.0
  %569 = vmatprep.subr.mxu0 0.0
  %570 = vmatpush1.msra.mxu0 0.0
  %571 = vmatprep.subr.mxu0 0.0
  %572 = vmatpush1.msra.mxu0 0.0
  %573 = vmatprep.subr.mxu0 0.0
  %574 = vmatpush1.msra.mxu0 0.0
  %575 = vmatprep.subr.mxu0 0.0
  %576 = vmatpush1.msra.mxu0 0.0
  %577 = vmatprep.subr.mxu0 0.0
  %578 = vmatpush1.msra.mxu0 0.0
  %579 = vmatprep.subr.mxu0 0.0
  %580 = vmatpush1.msra.mxu0 0.0
  %581 = vmatprep.subr.mxu0 0.0
  %582 = vmatpush1.msra.mxu0 0.0
  %583 = vmatprep.subr.mxu0 0.0
  %584 = vmatpush1.msra.mxu0 0.0
  %585 = vmatprep.subr.mxu0 0.0
  %586 = vmatpush1.msra.mxu0 0.0
  %587 = vmatprep.subr.mxu0 0.0
  %588 = vmatpush1.msra.mxu0 0.0
  %589 = vmatprep.subr.mxu0 0.0
  %590 = vmatpush1.msra.mxu0 0.0
  %591 = vmatprep.subr.mxu0 0.0
  %592 = vmatpush1.msra.mxu0 0.0
  %593 = vmatprep.subr.mxu0 0.0
  %594 = vmatpush1.msra.mxu0 0.0
  %595 = vmatprep.mubr.f32.mxu0 0.0
  %596 = vmatmul.mubr.f32.gmra.mrb[0].mxu0 %v529
  %v597 = vpop.f32.mrb[0].mxu0
  %v598 = vadd.f32 0.0, %v597
  %v599 = vpop.f32.mrb[0].mxu0
  %600 = vdwg.mxu0
  %v601 = vand.u32 2147483647, %v598
  %603 = vrot.lane.b32.xlu0 %v601, 127
  %v604 = vpop.permute.xlu0 %603
  %v606 = vmax.f32 %v601, %v604
  %607 = vrot.lane.b32.xlu0 %v601, 126
  %v608 = vpop.permute.xlu0 %607
  %v610 = vmax.f32 %v606, %v608
  %v611 = vsub.f32 %v601, %v610
  %v612 = vmul.f32 %v611, 1.442695
  %v613 = vpow.pop %v612
  %615 = vrot.lane.b32.xlu0 %v610, 1
  %v616 = vpop.permute.xlu0 %615
  %v618 = vsub.f32 %v601, %v616
  %v619 = vmul.f32 %v618, 1.442695
  %v620 = vpow.pop %v619
  %621 = vrot.lane.b32.xlu0 %v610, 2
  %v622 = vpop.permute.xlu0 %621
  %v624 = vsub.f32 %v601, %v622
  %v625 = vmul.f32 %v624, 1.442695
  %v626 = vpow.pop %v625
  %628 = vrot.lane.b32.xlu0 %v620, 127
  %v629 = vpop.permute.xlu0 %628
  %v631 = vadd.f32 %v613, %v629
  %633 = vrot.lane.b32.xlu0 %v626, 126
  %v634 = vpop.permute.xlu0 %633
  %v636 = vadd.f32 %v631, %v634
  %v637 = vrcp.pop %v636
  %v638 = vmul.f32 %v613, %v637
  %640 = vset.pattern.permute.xlu0 0
  %641 = vperm.xlu0 %640, %v638
  %v642 = vpop.permute.xlu0 %641
  %v644 = vmul.f32 %v421, %v642
  %646 = vrot.lane.b32.xlu0 %v637, 1
  %v647 = vpop.permute.xlu0 %646
  %v649 = vmul.f32 %v620, %v647
  %651 = vset.pattern.permute.xlu0 1
  %652 = vperm.xlu0 %651, %v649
  %v653 = vpop.permute.xlu0 %652
  %v655 = vmul.f32 %v502, %v653
  %v656 = vadd.f32 %v644, %v655
  %657 = vrot.lane.b32.xlu0 %v637, 2
  %v658 = vpop.permute.xlu0 %657
  %v660 = vmul.f32 %v626, %v658
  %662 = vset.pattern.permute.xlu0 2
  %663 = vperm.xlu0 %662, %v660
  %v664 = vpop.permute.xlu0 %663
  %v666 = vmul.f32 %v506, %v664
  %668 = vrot.lane.b32.xlu0 %v666, 64
  %v669 = vpop.permute.xlu0 %668
  %v671 = vadd.f32 %v656, %v669
  %v672 = vld [vmem:[%s6] sm:$0xff]
  %v673 = vld [vmem:[%s6 + $0x8] sm:$0xff]
  %v674 = vld [vmem:[%s6 + $0x10] sm:$0xff]
  %v675 = vld [vmem:[%s6 + $0x18] sm:$0xff]
  %v677 = vsel %vm511, %v671, 0
  %679 = vmatprep.subr.mxu0 0.0
  %680 = vmatpush1.msra.mxu0 %v672
  %681 = vmatprep.subr.mxu0 0.0
  %682 = vmatpush1.msra.mxu0 %v673
  %683 = vmatprep.subr.mxu0 0.0
  %684 = vmatpush1.msra.mxu0 %v674
  %685 = vmatprep.subr.mxu0 0.0
  %686 = vmatpush1.msra.mxu0 %v675
  %687 = vmatprep.subr.mxu0 0.0
  %688 = vmatpush1.msra.mxu0 0.0
  %689 = vmatprep.subr.mxu0 0.0
  %690 = vmatpush1.msra.mxu0 0.0
  %691 = vmatprep.subr.mxu0 0.0
  %692 = vmatpush1.msra.mxu0 0.0
  %693 = vmatprep.subr.mxu0 0.0
  %694 = vmatpush1.msra.mxu0 0.0
  %695 = vmatprep.subr.mxu0 0.0
  %696 = vmatpush1.msra.mxu0 0.0
  %697 = vmatprep.subr.mxu0 0.0
  %698 = vmatpush1.msra.mxu0 0.0
  %699 = vmatprep.subr.mxu0 0.0
  %700 = vmatpush1.msra.mxu0 0.0
  %701 = vmatprep.subr.mxu0 0.0
  %702 = vmatpush1.msra.mxu0 0.0
  %703 = vmatprep.subr.mxu0 0.0
  %704 = vmatpush1.msra.mxu0 0.0
  %705 = vmatprep.subr.mxu0 0.0
  %706 = vmatpush1.msra.mxu0 0.0
  %707 = vmatprep.subr.mxu0 0.0
  %708 = vmatpush1.msra.mxu0 0.0
  %709 = vmatprep.subr.mxu0 0.0
  %710 = vmatpush1.msra.mxu0 0.0
  %711 = vmatprep.subr.mxu0 0.0
  %712 = vmatpush1.msra.mxu0 0.0
  %713 = vmatprep.subr.mxu0 0.0
  %714 = vmatpush1.msra.mxu0 0.0
  %715 = vmatprep.subr.mxu0 0.0
  %716 = vmatpush1.msra.mxu0 0.0
  %717 = vmatprep.subr.mxu0 0.0
  %718 = vmatpush1.msra.mxu0 0.0
  %719 = vmatprep.subr.mxu0 0.0
  %720 = vmatpush1.msra.mxu0 0.0
  %721 = vmatprep.subr.mxu0 0.0
  %722 = vmatpush1.msra.mxu0 0.0
  %723 = vmatprep.subr.mxu0 0.0
  %724 = vmatpush1.msra.mxu0 0.0
  %725 = vmatprep.subr.mxu0 0.0
  %726 = vmatpush1.msra.mxu0 0.0
  %727 = vmatprep.subr.mxu0 0.0
  %728 = vmatpush1.msra.mxu0 0.0
  %729 = vmatprep.subr.mxu0 0.0
  %730 = vmatpush1.msra.mxu0 0.0
  %731 = vmatprep.subr.mxu0 0.0
  %732 = vmatpush1.msra.mxu0 0.0
  %733 = vmatprep.subr.mxu0 0.0
  %734 = vmatpush1.msra.mxu0 0.0
  %735 = vmatprep.subr.mxu0 0.0
  %736 = vmatpush1.msra.mxu0 0.0
  %737 = vmatprep.subr.mxu0 0.0
  %738 = vmatpush1.msra.mxu0 0.0
  %739 = vmatprep.subr.mxu0 0.0
  %740 = vmatpush1.msra.mxu0 0.0
  %741 = vmatprep.subr.mxu0 0.0
  %742 = vmatpush1.msra.mxu0 0.0
  %743 = vmatprep.mubr.f32.mxu0 0.0
  %744 = vmatmul.mubr.f32.gmra.mrb[0].mxu0 %v677
  %v745 = vpop.f32.mrb[0].mxu0
  %v746 = vadd.f32 0.0, %v745
  %v747 = vpop.f32.mrb[0].mxu0
  %748 = vdwg.mxu0
  %v750 = vlaneseq
  %v751 = vshrl.u32 %v750, 7
  %v752 = vsub.s32 0, %v751
  %v753 = vrot.slane %v30, %v752
  %755 = vmatprep.subr.mxu0 0.0
  %756 = vmatpush1.msra.mxu0 %v746
  %757 = vmatprep.subr.mxu0 0.0
  %758 = vmatpush1.msra.mxu0 0.0
  %759 = vmatprep.subr.mxu0 0.0
  %760 = vmatpush1.msra.mxu0 0.0
  %761 = vmatprep.subr.mxu0 0.0
  %762 = vmatpush1.msra.mxu0 0.0
  %763 = vmatprep.subr.mxu0 0.0
  %764 = vmatpush1.msra.mxu0 0.0
  %765 = vmatprep.subr.mxu0 0.0
  %766 = vmatpush1.msra.mxu0 0.0
  %767 = vmatprep.subr.mxu0 0.0
  %768 = vmatpush1.msra.mxu0 0.0
  %769 = vmatprep.subr.mxu0 0.0
  %770 = vmatpush1.msra.mxu0 0.0
  %771 = vmatprep.subr.mxu0 0.0
  %772 = vmatpush1.msra.mxu0 0.0
  %773 = vmatprep.subr.mxu0 0.0
  %774 = vmatpush1.msra.mxu0 0.0
  %775 = vmatprep.subr.mxu0 0.0
  %776 = vmatpush1.msra.mxu0 0.0
  %777 = vmatprep.subr.mxu0 0.0
  %778 = vmatpush1.msra.mxu0 0.0
  %779 = vmatprep.subr.mxu0 0.0
  %780 = vmatpush1.msra.mxu0 0.0
  %781 = vmatprep.subr.mxu0 0.0
  %782 = vmatpush1.msra.mxu0 0.0
  %783 = vmatprep.subr.mxu0 0.0
  %784 = vmatpush1.msra.mxu0 0.0
  %785 = vmatprep.subr.mxu0 0.0
  %786 = vmatpush1.msra.mxu0 0.0
  %787 = vmatprep.subr.mxu0 0.0
  %788 = vmatpush1.msra.mxu0 0.0
  %789 = vmatprep.subr.mxu0 0.0
  %790 = vmatpush1.msra.mxu0 0.0
  %791 = vmatprep.subr.mxu0 0.0
  %792 = vmatpush1.msra.mxu0 0.0
  %793 = vmatprep.subr.mxu0 0.0
  %794 = vmatpush1.msra.mxu0 0.0
  %795 = vmatprep.subr.mxu0 0.0
  %796 = vmatpush1.msra.mxu0 0.0
  %797 = vmatprep.subr.mxu0 0.0
  %798 = vmatpush1.msra.mxu0 0.0
  %799 = vmatprep.subr.mxu0 0.0
  %800 = vmatpush1.msra.mxu0 0.0
  %801 = vmatprep.subr.mxu0 0.0
  %802 = vmatpush1.msra.mxu0 0.0
  %803 = vmatprep.subr.mxu0 0.0
  %804 = vmatpush1.msra.mxu0 0.0
  %805 = vmatprep.subr.mxu0 0.0
  %806 = vmatpush1.msra.mxu0 0.0
  %807 = vmatprep.subr.mxu0 0.0
  %808 = vmatpush1.msra.mxu0 0.0
  %809 = vmatprep.subr.mxu0 0.0
  %810 = vmatpush1.msra.mxu0 0.0
  %811 = vmatprep.subr.mxu0 0.0
  %812 = vmatpush1.msra.mxu0 0.0
  %813 = vmatprep.subr.mxu0 0.0
  %814 = vmatpush1.msra.mxu0 0.0
  %815 = vmatprep.subr.mxu0 0.0
  %816 = vmatpush1.msra.mxu0 0.0
  %817 = vmatprep.subr.mxu0 0.0
  %818 = vmatpush1.msra.mxu0 0.0
  %819 = vmatprep.mubr.f32.mxu0 0.0
  %820 = vmatmul.mubr.f32.gmra.mrb[0].mxu0 %v352
  %v821 = vpop.f32.mrb[0].mxu0
  %v822 = vadd.f32 %v753, %v821
  %v823 = vpop.f32.mrb[0].mxu0
  %824 = vdwg.mxu0
  %826 = vrot.lane.b32.xlu0 %v746, 126
  %v827 = vpop.permute.xlu0 %826
  %829 = vrot.lane.b32.xlu0 %v753, 126
  %v830 = vpop.permute.xlu0 %829
  %832 = vmatprep.subr.mxu0 0.0
  %833 = vmatpush1.msra.mxu0 %v827
  %834 = vmatprep.subr.mxu0 0.0
  %835 = vmatpush1.msra.mxu0 0.0
  %836 = vmatprep.subr.mxu0 0.0
  %837 = vmatpush1.msra.mxu0 0.0
  %838 = vmatprep.subr.mxu0 0.0
  %839 = vmatpush1.msra.mxu0 0.0
  %840 = vmatprep.subr.mxu0 0.0
  %841 = vmatpush1.msra.mxu0 0.0
  %842 = vmatprep.subr.mxu0 0.0
  %843 = vmatpush1.msra.mxu0 0.0
  %844 = vmatprep.subr.mxu0 0.0
  %845 = vmatpush1.msra.mxu0 0.0
  %846 = vmatprep.subr.mxu0 0.0
  %847 = vmatpush1.msra.mxu0 0.0
  %848 = vmatprep.subr.mxu0 0.0
  %849 = vmatpush1.msra.mxu0 0.0
  %850 = vmatprep.subr.mxu0 0.0
  %851 = vmatpush1.msra.mxu0 0.0
  %852 = vmatprep.subr.mxu0 0.0
  %853 = vmatpush1.msra.mxu0 0.0
  %854 = vmatprep.subr.mxu0 0.0
  %855 = vmatpush1.msra.mxu0 0.0
  %856 = vmatprep.subr.mxu0 0.0
  %857 = vmatpush1.msra.mxu0 0.0
  %858 = vmatprep.subr.mxu0 0.0
  %859 = vmatpush1.msra.mxu0 0.0
  %860 = vmatprep.subr.mxu0 0.0
  %861 = vmatpush1.msra.mxu0 0.0
  %862 = vmatprep.subr.mxu0 0.0
  %863 = vmatpush1.msra.mxu0 0.0
  %864 = vmatprep.subr.mxu0 0.0
  %865 = vmatpush1.msra.mxu0 0.0
  %866 = vmatprep.subr.mxu0 0.0
  %867 = vmatpush1.msra.mxu0 0.0
  %868 = vmatprep.subr.mxu0 0.0
  %869 = vmatpush1.msra.mxu0 0.0
  %870 = vmatprep.subr.mxu0 0.0
  %871 = vmatpush1.msra.mxu0 0.0
  %872 = vmatprep.subr.mxu0 0.0
  %873 = vmatpush1.msra.mxu0 0.0
  %874 = vmatprep.subr.mxu0 0.0
  %875 = vmatpush1.msra.mxu0 0.0
  %876 = vmatprep.subr.mxu0 0.0
  %877 = vmatpush1.msra.mxu0 0.0
  %878 = vmatprep.subr.mxu0 0.0
  %879 = vmatpush1.msra.mxu0 0.0
  %880 = vmatprep.subr.mxu0 0.0
  %881 = vmatpush1.msra.mxu0 0.0
  %882 = vmatprep.subr.mxu0 0.0
  %883 = vmatpush1.msra.mxu0 0.0
  %884 = vmatprep.subr.mxu0 0.0
  %885 = vmatpush1.msra.mxu0 0.0
  %886 = vmatprep.subr.mxu0 0.0
  %887 = vmatpush1.msra.mxu0 0.0
  %888 = vmatprep.subr.mxu0 0.0
  %889 = vmatpush1.msra.mxu0 0.0
  %890 = vmatprep.subr.mxu0 0.0
  %891 = vmatpush1.msra.mxu0 0.0
  %892 = vmatprep.subr.mxu0 0.0
  %893 = vmatpush1.msra.mxu0 0.0
  %894 = vmatprep.subr.mxu0 0.0
  %895 = vmatpush1.msra.mxu0 0.0
  %896 = vmatprep.mubr.f32.mxu0 0.0
  %897 = vmatmul.mubr.f32.gmra.mrb[0].mxu0 %v433
  %v898 = vpop.f32.mrb[0].mxu0
  %v899 = vadd.f32 %v830, %v898
  %v900 = vpop.f32.mrb[0].mxu0
  %901 = vdwg.mxu0
  %v902 = vadd.f32 %v746, %v753
  %v903 = vtanh.pop %v902
  %v904 = vadd.f32 %v899, %v822
  %906 = vrot.lane.b32.xlu0 %v903, 124
  %v907 = vpop.permute.xlu0 %906
  %v909 = vadd.f32 %v904, %v907
  %vm910 = vcmask 15360
  %911 = vst.msk [vmem:[%s8] sm:$0xff] %vm910, %v909
  // Predicated region
  $region34: #{rsgcn_forward.1} parent=0 // pred_check
    _
  $region35: #{rsgcn_forward.1} parent=0 // pred_check_branch
    %913 = sbr.rel (0) target = $region37
  $region36: #{rsgcn_forward.1} parent=0 // pred_region
    _
  $region37: #{rsgcn_forward.1} parent=0 // pred_fallthru
    _
  // Predicated region
  $region38: #{rsgcn_forward.1} parent=0 // pred_check
    _
  $region39: #{rsgcn_forward.1} parent=0 // pred_check_branch
    %915 = sbr.rel (0) target = $region41
  $region40: #{rsgcn_forward.1} parent=0 // pred_region
    _
  $region41: #{rsgcn_forward.1} parent=0 // pred_fallthru
    _

</llo_original>
